<compile_context>
chip_gen: v7x
topology: tpu7x:2x2x1
jax: 0.10.0
libtpu: 0.0.40
codegen_flags: <defaults>
</compile_context>

<pallas_src>
import functools

import jax
import jax.numpy as jnp
from jax import lax
from jax.experimental import pallas as pl
from jax.experimental.pallas import tpu as pltpu


def _round_up(x, m):
    return ((x + m - 1) // m) * m


def mlp_forward_kernel(state_ref, control_ref,
                       w1s_ref, w1c_ref, b1_ref,
                       w2_ref, b2_ref,
                       w3_ref, b3_ref,
                       out_ref, *, batch, tm):
    """One batch tile of:
         h1  = relu(state @ W1s + control @ W1c + b1)   # == relu([s,c] @ W1 + b1)
         h2  = relu(h1 @ W2 + b2)
         out = (h2 @ W3 + b3) + state                   # predict_delta = True
       MXU matmuls accumulate in f32; elementwise math stays f32 (v5e VPU has
       no bf16); cast once at the final store.
    """
    state = state_ref[...]
    control = control_ref[...]

    # Layer 1: split matmul replaces the wrapper-side concat.
    h = jnp.dot(state, w1s_ref[...], preferred_element_type=jnp.float32)
    h = h + jnp.dot(control, w1c_ref[...], preferred_element_type=jnp.float32)
    h = jnp.maximum(h + b1_ref[...].astype(jnp.float32), 0.0)

    # Layer 2.
    h = jnp.dot(h.astype(w2_ref.dtype), w2_ref[...],
                preferred_element_type=jnp.float32)
    h = jnp.maximum(h + b2_ref[...].astype(jnp.float32), 0.0)

    # Layer 3 + residual.
    y = jnp.dot(h.astype(w3_ref.dtype), w3_ref[...],
                preferred_element_type=jnp.float32)
    y = y + b3_ref[...].astype(jnp.float32) + state.astype(jnp.float32)

    if batch % tm != 0:
        # Ragged final tile: out-of-bounds rows hold unspecified input data.
        # Rows are independent (no cross-row reduction) and their stores are
        # discarded by Pallas, but zero them anyway so nothing surprising
        # (NaN/inf) reaches the store path.  Trace-time `if` keeps the common
        # divisible case completely untouched.
        is_last = pl.program_id(0) == pl.num_programs(0) - 1
        rem = batch % tm
        row = lax.broadcasted_iota(jnp.int32, (tm, 1), 0)
        valid = jnp.logical_or(jnp.logical_not(is_last), row < rem)
        y = jnp.where(valid, y, 0.0)

    out_ref[...] = y.astype(out_ref.dtype)


def _choose_tile(batch, tile_m):
    """Pick the batch tile.

    - batch <= min(tile_m, 256): single exact tile (block dim == full array
      dim, always a legal block shape; no padding, no masking).
    - otherwise: cap at tile_m but keep >= 2 grid steps (v7x has 2 TCs and the
      BlockSpec pipeline needs depth); round to a sublane-friendly multiple.
    """
    if batch <= min(tile_m, 256):
        return batch
    half = _round_up(pl.cdiv(batch, 2), 256)
    return _round_up(min(tile_m, half, batch), 8)


@functools.partial(jax.jit, static_argnames=("tile_m",))
def mlp_forward(state, control, params, tile_m=4096):
    """Pallas wrapper reproducing MLPForwardModel.forward(state, control)."""
    w1s, w1c, b1, w2, b2, w3, b3 = params
    batch, nz = state.shape
    nu = control.shape[1]

    tm = _choose_tile(batch, tile_m)
    grid = (pl.cdiv(batch, tm),)

    # Weights/biases: full-array blocks with a constant index_map -> fetched
    # once, resident in VMEM across the whole (parallel) batch grid.
    def resident(a):
        return pl.BlockSpec(a.shape, lambda i, _nd=a.ndim: (0,) * _nd)

    kernel = functools.partial(mlp_forward_kernel, batch=batch, tm=tm)

    # If xprof ever shows exposed input-DMA waits on v5e, bump the state /
    # control in_specs to pipeline_mode=pl.Buffered(3); not needed by default.
    return pl.pallas_call(
        kernel,
        out_shape=jax.ShapeDtypeStruct((batch, nz), state.dtype),
        grid_spec=pltpu.PrefetchScalarGridSpec(
            num_scalar_prefetch=0,
            grid=grid,
            in_specs=[
                pl.BlockSpec((tm, nz), lambda i: (i, 0)),   # state (also residual)
                pl.BlockSpec((tm, nu), lambda i: (i, 0)),   # control
                resident(w1s), resident(w1c), resident(b1),
                resident(w2), resident(b2),
                resident(w3), resident(b3),
            ],
            out_specs=pl.BlockSpec((tm, nz), lambda i: (i, 0)),
        ),
        compiler_params=pltpu.CompilerParams(
            dimension_semantics=("parallel",)),  # v7x: shard batch over 2 TCs
    )(state, control, w1s, w1c, b1, w2, b2, w3, b3)


def init_params(key, nz, nu, dtype=jnp.float32):
    """Deterministic init matching MLPForwardModel(nz, nu):
       Linear(nz+nu -> nz), ReLU, Linear(nz -> nz), ReLU, Linear(nz -> nz)
       (hidden_dim is overridden to nz inside the torch __init__).
       W1 is returned pre-split into its state / control row blocks."""
    ks = jax.random.split(key, 6)

    def linear(kw, kb, fan_in, fan_out):
        bound = 1.0 / jnp.sqrt(fan_in)   # torch default U(-1/sqrt(fan_in), ...)
        w = jax.random.uniform(kw, (fan_in, fan_out), dtype, -bound, bound)
        b = jax.random.uniform(kb, (1, fan_out), dtype, -bound, bound)
        return w, b

    w1, b1 = linear(ks[0], ks[1], nz + nu, nz)
    w2, b2 = linear(ks[2], ks[3], nz, nz)
    w3, b3 = linear(ks[4], ks[5], nz, nz)
    return (w1[:nz], w1[nz:], b1, w2, b2, w3, b3)


def reference_forward(state, control, params):
    """Pure-JAX reference (mirrors the torch forward exactly)."""
    w1s, w1c, b1, w2, b2, w3, b3 = params
    w1 = jnp.concatenate([w1s, w1c], axis=0)
    x = jnp.concatenate([state, control], axis=1)
    h = jnp.maximum(x @ w1 + b1, 0.0)
    h = jnp.maximum(h @ w2 + b2, 0.0)
    return (h @ w3 + b3) + state


if __name__ == "__main__":
    key = jax.random.PRNGKey(0)
    k_params, k_state, k_control, k_sbig, k_cbig = jax.random.split(key, 5)

    nz, nu = 32, 8
    params = init_params(k_params, nz, nu, dtype=jnp.float32)

    # --- small batch: single exact tile, f32, tight correctness check ---
    batch = 8
    state = jax.random.normal(k_state, (batch, nz), jnp.float32)
    control = jax.random.normal(k_control, (batch, nu), jnp.float32)
    ref = reference_forward(state, control, params)
    out_f32 = jax.block_until_ready(mlp_forward(state, control, params))
    assert out_f32.shape == (batch, nz)
    assert jnp.allclose(out_f32, ref, atol=1e-5, rtol=1e-5), "f32 mismatch vs reference"

    # --- multi-tile + ragged final tile path (tm=512, grid=2, 600 % 512 != 0) ---
    batch_big = 600
    state_big = jax.random.normal(k_sbig, (batch_big, nz), jnp.float32)
    control_big = jax.random.normal(k_cbig, (batch_big, nu), jnp.float32)
    ref_big = reference_forward(state_big, control_big, params)
    out_big = jax.block_until_ready(mlp_forward(state_big, control_big, params))
    assert out_big.shape == (batch_big, nz)
    assert jnp.allclose(out_big, ref_big, atol=1e-5, rtol=1e-5), "ragged-tile mismatch"

    # --- bf16 I/O path (bandwidth-optimized default for v5e/v6e) ---
    params_bf16 = jax.tree_util.tree_map(lambda a: a.astype(jnp.bfloat16), params)
    out_bf16 = jax.block_until_ready(
        mlp_forward(state.astype(jnp.bfloat16),
                    control.astype(jnp.bfloat16),
                    params_bf16))
    assert out_bf16.shape == (batch, nz)
    max_err = float(jnp.max(jnp.abs(out_bf16.astype(jnp.float32) - ref)))
    assert max_err < 0.25, f"bf16 max error too large: {max_err}"

    print("KERNEL_OK")
</pallas_src>

<mosaic_0001>
module attributes {stable_mosaic.version = 11 : i64} {
  func.func @mlp_forward_kernel(%arg0: i32, %arg1: memref<8x32xf32, #tpu.memory_space<vmem>>, %arg2: memref<8x8xf32, #tpu.memory_space<vmem>>, %arg3: memref<32x32xf32, #tpu.memory_space<vmem>>, %arg4: memref<8x32xf32, #tpu.memory_space<vmem>>, %arg5: memref<1x32xf32, #tpu.memory_space<vmem>>, %arg6: memref<32x32xf32, #tpu.memory_space<vmem>>, %arg7: memref<1x32xf32, #tpu.memory_space<vmem>>, %arg8: memref<32x32xf32, #tpu.memory_space<vmem>>, %arg9: memref<1x32xf32, #tpu.memory_space<vmem>>, %arg10: memref<8x32xf32, #tpu.memory_space<vmem>>) attributes {dimension_semantics = [#tpu.dimension_semantics<parallel>], iteration_bounds = array<i64: 1>, scalar_prefetch = 0 : i64, scratch_operands = 0 : i64, tpu.core_type = #tpu.core_type<tc>, window_params = [{transform_indices = @transform_0, window_bounds = array<i64: 8, 32>}, {transform_indices = @transform_1, window_bounds = array<i64: 8, 8>}, {pipeline_mode = #tpu.pipeline_mode<synchronous>, transform_indices = @transform_2, window_bounds = array<i64: 32, 32>}, {pipeline_mode = #tpu.pipeline_mode<synchronous>, transform_indices = @transform_3, window_bounds = array<i64: 8, 32>}, {pipeline_mode = #tpu.pipeline_mode<synchronous>, transform_indices = @transform_4, window_bounds = array<i64: 1, 32>}, {pipeline_mode = #tpu.pipeline_mode<synchronous>, transform_indices = @transform_5, window_bounds = array<i64: 32, 32>}, {pipeline_mode = #tpu.pipeline_mode<synchronous>, transform_indices = @transform_6, window_bounds = array<i64: 1, 32>}, {pipeline_mode = #tpu.pipeline_mode<synchronous>, transform_indices = @transform_7, window_bounds = array<i64: 32, 32>}, {pipeline_mode = #tpu.pipeline_mode<synchronous>, transform_indices = @transform_8, window_bounds = array<i64: 1, 32>}, {transform_indices = @transform_9, window_bounds = array<i64: 8, 32>}]} {
    %c0 = arith.constant 0 : index
    %c0_0 = arith.constant 0 : index
    %0 = vector.load %arg1[%c0, %c0_0] : memref<8x32xf32, #tpu.memory_space<vmem>>, vector<8x32xf32>
    %c0_1 = arith.constant 0 : index
    %c0_2 = arith.constant 0 : index
    %1 = vector.load %arg2[%c0_1, %c0_2] : memref<8x8xf32, #tpu.memory_space<vmem>>, vector<8x8xf32>
    %c0_3 = arith.constant 0 : index
    %c0_4 = arith.constant 0 : index
    %2 = vector.load %arg3[%c0_3, %c0_4] : memref<32x32xf32, #tpu.memory_space<vmem>>, vector<32x32xf32>
    %cst = arith.constant dense<0.000000e+00> : vector<8x32xf32>
    %3 = tpu.matmul %0, %2, %cst {dimension_numbers = #tpu.dot_dimension_numbers<[1], [0], [0], [1], [0, 0, 1, 1], [], []>} : vector<8x32xf32>, vector<32x32xf32>, vector<8x32xf32> -> vector<8x32xf32>
    %c0_5 = arith.constant 0 : index
    %c0_6 = arith.constant 0 : index
    %4 = vector.load %arg4[%c0_5, %c0_6] : memref<8x32xf32, #tpu.memory_space<vmem>>, vector<8x32xf32>
    %cst_7 = arith.constant dense<0.000000e+00> : vector<8x32xf32>
    %5 = tpu.matmul %1, %4, %cst_7 {dimension_numbers = #tpu.dot_dimension_numbers<[1], [0], [0], [1], [0, 0, 1, 1], [], []>} : vector<8x8xf32>, vector<8x32xf32>, vector<8x32xf32> -> vector<8x32xf32>
    %6 = arith.addf %3, %5 : vector<8x32xf32>
    %c0_8 = arith.constant 0 : index
    %c0_9 = arith.constant 0 : index
    %7 = vector.load %arg5[%c0_8, %c0_9] : memref<1x32xf32, #tpu.memory_space<vmem>>, vector<1x32xf32>
    %8 = vector.broadcast %7 : vector<1x32xf32> to vector<8x32xf32>
    %9 = arith.addf %6, %8 : vector<8x32xf32>
    %cst_10 = arith.constant 0.000000e+00 : f32
    %10 = vector.broadcast %cst_10 : f32 to vector<8x32xf32>
    %11 = arith.maximumf %9, %10 : vector<8x32xf32>
    %c0_11 = arith.constant 0 : index
    %c0_12 = arith.constant 0 : index
    %12 = vector.load %arg6[%c0_11, %c0_12] : memref<32x32xf32, #tpu.memory_space<vmem>>, vector<32x32xf32>
    %cst_13 = arith.constant dense<0.000000e+00> : vector<8x32xf32>
    %13 = tpu.matmul %11, %12, %cst_13 {dimension_numbers = #tpu.dot_dimension_numbers<[1], [0], [0], [1], [0, 0, 1, 1], [], []>} : vector<8x32xf32>, vector<32x32xf32>, vector<8x32xf32> -> vector<8x32xf32>
    %c0_14 = arith.constant 0 : index
    %c0_15 = arith.constant 0 : index
    %14 = vector.load %arg7[%c0_14, %c0_15] : memref<1x32xf32, #tpu.memory_space<vmem>>, vector<1x32xf32>
    %15 = vector.broadcast %14 : vector<1x32xf32> to vector<8x32xf32>
    %16 = arith.addf %13, %15 : vector<8x32xf32>
    %cst_16 = arith.constant 0.000000e+00 : f32
    %17 = vector.broadcast %cst_16 : f32 to vector<8x32xf32>
    %18 = arith.maximumf %16, %17 : vector<8x32xf32>
    %c0_17 = arith.constant 0 : index
    %c0_18 = arith.constant 0 : index
    %19 = vector.load %arg8[%c0_17, %c0_18] : memref<32x32xf32, #tpu.memory_space<vmem>>, vector<32x32xf32>
    %cst_19 = arith.constant dense<0.000000e+00> : vector<8x32xf32>
    %20 = tpu.matmul %18, %19, %cst_19 {dimension_numbers = #tpu.dot_dimension_numbers<[1], [0], [0], [1], [0, 0, 1, 1], [], []>} : vector<8x32xf32>, vector<32x32xf32>, vector<8x32xf32> -> vector<8x32xf32>
    %c0_20 = arith.constant 0 : index
    %c0_21 = arith.constant 0 : index
    %21 = vector.load %arg9[%c0_20, %c0_21] : memref<1x32xf32, #tpu.memory_space<vmem>>, vector<1x32xf32>
    %22 = vector.broadcast %21 : vector<1x32xf32> to vector<8x32xf32>
    %23 = arith.addf %20, %22 : vector<8x32xf32>
    %24 = arith.addf %23, %0 : vector<8x32xf32>
    %c0_22 = arith.constant 0 : index
    %c0_23 = arith.constant 0 : index
    %25 = vector.load %arg10[%c0_22, %c0_23] : memref<8x32xf32, #tpu.memory_space<vmem>>, vector<8x32xf32>
    tpu.vector_store %arg10[%c0_22, %c0_23], %24 {strides = array<i32>} : memref<8x32xf32, #tpu.memory_space<vmem>>, vector<8x32xf32>,
    return
  }
  func.func @transform_0(%arg0: i32) -> (i32, i32) {
    %c0_i32 = arith.constant 0 : i32
    %c0_i32_0 = arith.constant 0 : i32
    return %arg0, %c0_i32 : i32, i32
  }
  func.func @transform_1(%arg0: i32) -> (i32, i32) {
    %c0_i32 = arith.constant 0 : i32
    %c0_i32_0 = arith.constant 0 : i32
    return %arg0, %c0_i32 : i32, i32
  }
  func.func @transform_2(%arg0: i32) -> (i32, i32) {
    %c0_i32 = arith.constant 0 : i32
    %c0_i32_0 = arith.constant 0 : i32
    %c0_i32_1 = arith.constant 0 : i32
    return %c0_i32, %c0_i32_0 : i32, i32
  }
  func.func @transform_3(%arg0: i32) -> (i32, i32) {
    %c0_i32 = arith.constant 0 : i32
    %c0_i32_0 = arith.constant 0 : i32
    %c0_i32_1 = arith.constant 0 : i32
    return %c0_i32, %c0_i32_0 : i32, i32
  }
  func.func @transform_4(%arg0: i32) -> (i32, i32) {
    %c0_i32 = arith.constant 0 : i32
    %c0_i32_0 = arith.constant 0 : i32
    %c0_i32_1 = arith.constant 0 : i32
    return %c0_i32, %c0_i32_0 : i32, i32
  }
  func.func @transform_5(%arg0: i32) -> (i32, i32) {
    %c0_i32 = arith.constant 0 : i32
    %c0_i32_0 = arith.constant 0 : i32
    %c0_i32_1 = arith.constant 0 : i32
    return %c0_i32, %c0_i32_0 : i32, i32
  }
  func.func @transform_6(%arg0: i32) -> (i32, i32) {
    %c0_i32 = arith.constant 0 : i32
    %c0_i32_0 = arith.constant 0 : i32
    %c0_i32_1 = arith.constant 0 : i32
    return %c0_i32, %c0_i32_0 : i32, i32
  }
  func.func @transform_7(%arg0: i32) -> (i32, i32) {
    %c0_i32 = arith.constant 0 : i32
    %c0_i32_0 = arith.constant 0 : i32
    %c0_i32_1 = arith.constant 0 : i32
    return %c0_i32, %c0_i32_0 : i32, i32
  }
  func.func @transform_8(%arg0: i32) -> (i32, i32) {
    %c0_i32 = arith.constant 0 : i32
    %c0_i32_0 = arith.constant 0 : i32
    %c0_i32_1 = arith.constant 0 : i32
    return %c0_i32, %c0_i32_0 : i32, i32
  }
  func.func @transform_9(%arg0: i32) -> (i32, i32) {
    %c0_i32 = arith.constant 0 : i32
    %c0_i32_0 = arith.constant 0 : i32
    return %arg0, %c0_i32 : i32, i32
  }
}

</mosaic_0001>

<llo_original>
// kernel: mlp_forward.1
$region0: #{mlp_forward.1}
  #allocation0 [shape = 'u32[]', space=smem, size = 0x4, offset = 0x4, fixed_abs, tag = 'smem constant byte address 0x4 - core index']
  #allocation1 [shape = 'u32[144,128]{1,0:T(1,128)}', space=vmem, size = 0x12000, scoped, tag = 'internal scratch']
  %s0 = inlined_call_operand.hbm [shape: f32[8,32], index: 0, kind: input, shape index: {}]
  %s1 = inlined_call_operand.hbm [shape: f32[8,8], index: 1, kind: input, shape index: {}]
  %s2 = inlined_call_operand.hbm [shape: f32[32,32], index: 2, kind: input, shape index: {}]
  %s3 = inlined_call_operand.vmem [shape: f32[8,32], index: 3, kind: input, shape index: {}]
  %s4 = inlined_call_operand.vmem [shape: f32[1,32], index: 4, kind: input, shape index: {}]
  %s5 = inlined_call_operand.hbm [shape: f32[32,32], index: 5, kind: input, shape index: {}]
  %s6 = inlined_call_operand.vmem [shape: f32[1,32], index: 6, kind: input, shape index: {}]
  %s7 = inlined_call_operand.hbm [shape: f32[32,32], index: 7, kind: input, shape index: {}]
  %s8 = inlined_call_operand.vmem [shape: f32[1,32], index: 8, kind: input, shape index: {}]
  %s9 = inlined_call_operand.hbm [shape: f32[8,32], index: 9, kind: output, shape index: {}]
  %s10 = sld [smem:[#allocation0]]
  $region66: #{mlp_forward.1} parent=0
    _
  %s12 = ssub.s32 1, %s10
  %s13 = scalar_select 0, %s12, %s10
  $region1: #{mlp_forward.1} parent=0
    #allocation2 [shape = 'u8[4096]{0}', space=vmem, size = 0x1000, scoped, tag = 'input window, operand 0, single buffered']
    #allocation3 [shape = 's32[1]{0}', space=sflag, size = 0x4, scoped, tag = 'scoped memory for mlp_forward.1']
    #allocation4 [shape = 's32[1]{0}', space=sflag, size = 0x4, scoped, tag = 'scoped memory for mlp_forward.1']
    #allocation5 [shape = 'u8[4096]{0}', space=vmem, size = 0x1000, scoped, tag = 'input window, operand 1, single buffered']
    #allocation6 [shape = 's32[1]{0}', space=sflag, size = 0x4, scoped, tag = 'scoped memory for mlp_forward.1']
    #allocation7 [shape = 'u8[16384]{0}', space=vmem, size = 0x4000, scoped, tag = 'input window, operand 2, single buffered']
    #allocation8 [shape = 'u8[16384]{0}', space=vmem, size = 0x4000, scoped, tag = 'input window, operand 5, single buffered']
    #allocation9 [shape = 's32[1]{0}', space=sflag, size = 0x4, scoped, tag = 'scoped memory for mlp_forward.1']
    #allocation10 [shape = 'u8[16384]{0}', space=vmem, size = 0x4000, scoped, tag = 'input window, operand 7, single buffered']
    #allocation11 [shape = 'u8[4096]{0}', space=vmem, size = 0x1000, scoped, tag = 'output window, operand 0, single buffered']
    %14 = vsyncpa [#allocation3], 0
    %15 = vsyncpa [#allocation6], 0
    %16 = vsyncpa [#allocation9], 0
    %17 = vsyncpa [#allocation4], 0
    // Predicated region
    $region2: #{mlp_forward.1} parent=1 // pred_check
      _
    $region3: #{mlp_forward.1} parent=1 // pred_check_branch
      %19 = sbr.rel (0) target = $region5
    $region4: #{mlp_forward.1} parent=1 // pred_region
      %s21 = ssub.s32 128, 128
      %22 = vsyncadd [#allocation3], %s21
      %s24 = sshll.u32 [#allocation2], 4
      %s25 = int_to_ptr.vmem [resolvable:$true] %s24
      %27 = dma.hbm_to_vmem [thread:$0]  %s0, 128, %s25, [#allocation3]
    $region5: #{mlp_forward.1} parent=1 // pred_fallthru
      _
    // Predicated region
    $region6: #{mlp_forward.1} parent=1 // pred_check
      _
    $region7: #{mlp_forward.1} parent=1 // pred_check_branch
      %29 = sbr.rel (0) target = $region9
    $region8: #{mlp_forward.1} parent=1 // pred_region
      %s31 = ssub.s32 128, 128
      %32 = vsyncadd [#allocation6], %s31
      %s34 = sshll.u32 [#allocation5], 4
      %s35 = int_to_ptr.vmem [resolvable:$true] %s34
      %37 = dma.hbm_to_vmem [thread:$0]  %s1, 128, %s35, [#allocation6]
    $region9: #{mlp_forward.1} parent=1 // pred_fallthru
      _
    // Predicated region
    $region10: #{mlp_forward.1} parent=1 // pred_check
      _
    $region11: #{mlp_forward.1} parent=1 // pred_check_branch
      %39 = sbr.rel (0) target = $region13
    $region12: #{mlp_forward.1} parent=1 // pred_region
      %s41 = ssub.s32 512, 512
      %42 = vsyncadd [#allocation6], %s41
      %s43 = sshll.u32 [#allocation7], 4
      %s44 = int_to_ptr.vmem [resolvable:$true] %s43
      %49 = dma.hbm_to_vmem [thread:$0]  %s2, 512, %s44, [#allocation6], 128, 128, 8
    $region13: #{mlp_forward.1} parent=1 // pred_fallthru
      _
    // Predicated region
    $region14: #{mlp_forward.1} parent=1 // pred_check
      _
    $region15: #{mlp_forward.1} parent=1 // pred_check_branch
      %51 = sbr.rel (0) target = $region17
    $region16: #{mlp_forward.1} parent=1 // pred_region
      _
    $region17: #{mlp_forward.1} parent=1 // pred_fallthru
      _
    // Predicated region
    $region18: #{mlp_forward.1} parent=1 // pred_check
      _
    $region19: #{mlp_forward.1} parent=1 // pred_check_branch
      %53 = sbr.rel (0) target = $region21
    $region20: #{mlp_forward.1} parent=1 // pred_region
      _
    $region21: #{mlp_forward.1} parent=1 // pred_fallthru
      _
    // Predicated region
    $region22: #{mlp_forward.1} parent=1 // pred_check
      _
    $region23: #{mlp_forward.1} parent=1 // pred_check_branch
      %55 = sbr.rel (0) target = $region25
    $region24: #{mlp_forward.1} parent=1 // pred_region
      %s57 = ssub.s32 512, 512
      %58 = vsyncadd [#allocation9], %s57
      %s59 = sshll.u32 [#allocation8], 4
      %s60 = int_to_ptr.vmem [resolvable:$true] %s59
      %65 = dma.hbm_to_vmem [thread:$0]  %s5, 512, %s60, [#allocation9], 128, 128, 8
    $region25: #{mlp_forward.1} parent=1 // pred_fallthru
      _
    // Predicated region
    $region26: #{mlp_forward.1} parent=1 // pred_check
      _
    $region27: #{mlp_forward.1} parent=1 // pred_check_branch
      %67 = sbr.rel (0) target = $region29
    $region28: #{mlp_forward.1} parent=1 // pred_region
      _
    $region29: #{mlp_forward.1} parent=1 // pred_fallthru
      _
    // Predicated region
    $region30: #{mlp_forward.1} parent=1 // pred_check
      _
    $region31: #{mlp_forward.1} parent=1 // pred_check_branch
      %69 = sbr.rel (0) target = $region33
    $region32: #{mlp_forward.1} parent=1 // pred_region
      %s71 = ssub.s32 512, 512
      %72 = vsyncadd [#allocation9], %s71
      %s73 = sshll.u32 [#allocation10], 4
      %s74 = int_to_ptr.vmem [resolvable:$true] %s73
      %79 = dma.hbm_to_vmem [thread:$0]  %s7, 512, %s74, [#allocation9], 128, 128, 8
    $region33: #{mlp_forward.1} parent=1 // pred_fallthru
      _
    // Predicated region
    $region34: #{mlp_forward.1} parent=1 // pred_check
      _
    $region35: #{mlp_forward.1} parent=1 // pred_check_branch
      %81 = sbr.rel (0) target = $region37
    $region36: #{mlp_forward.1} parent=1 // pred_region
      _
    $region37: #{mlp_forward.1} parent=1 // pred_fallthru
      _
    // Predicated region
    $region38: #{mlp_forward.1} parent=1 // pred_check
      _
    $region39: #{mlp_forward.1} parent=1 // pred_check_branch
      %83 = sbr.rel (0) target = $region41
    $region40: #{mlp_forward.1} parent=1 // pred_region
      %84 = dma.done [#allocation3], 128
    $region41: #{mlp_forward.1} parent=1 // pred_fallthru
      _
    // Predicated region
    $region42: #{mlp_forward.1} parent=1 // pred_check
      _
    $region43: #{mlp_forward.1} parent=1 // pred_check_branch
      %86 = sbr.rel (0) target = $region45
    $region44: #{mlp_forward.1} parent=1 // pred_region
      %87 = dma.done [#allocation6], 128
    $region45: #{mlp_forward.1} parent=1 // pred_fallthru
      _
    // Predicated region
    $region46: #{mlp_forward.1} parent=1 // pred_check
      _
    $region47: #{mlp_forward.1} parent=1 // pred_check_branch
      %89 = sbr.rel (0) target = $region49
    $region48: #{mlp_forward.1} parent=1 // pred_region
      %90 = dma.done [#allocation6], 512
    $region49: #{mlp_forward.1} parent=1 // pred_fallthru
      _
    // Predicated region
    $region50: #{mlp_forward.1} parent=1 // pred_check
      _
    $region51: #{mlp_forward.1} parent=1 // pred_check_branch
      %92 = sbr.rel (0) target = $region53
    $region52: #{mlp_forward.1} parent=1 // pred_region
      %93 = dma.done [#allocation9], 512
    $region53: #{mlp_forward.1} parent=1 // pred_fallthru
      _
    // Predicated region
    $region54: #{mlp_forward.1} parent=1 // pred_check
      _
    $region55: #{mlp_forward.1} parent=1 // pred_check_branch
      %95 = sbr.rel (0) target = $region57
    $region56: #{mlp_forward.1} parent=1 // pred_region
      %96 = dma.done [#allocation9], 512
    $region57: #{mlp_forward.1} parent=1 // pred_fallthru
      _
    %v97 = vld [vmem:[#allocation2] sm:$0xff]
    %v98 = vld [vmem:[#allocation5] sm:$0xff]
    %v99 = vld [vmem:[#allocation7] sm:$0xff]
    %v100 = vld [vmem:[#allocation7 + $0x8] sm:$0xff]
    %v101 = vld [vmem:[#allocation7 + $0x10] sm:$0xff]
    %v102 = vld [vmem:[#allocation7 + $0x18] sm:$0xff]
    %v103 = vld [vmem:[%s3] sm:$0xff]
    %vm104 = vcmask 64512
    %v106 = vsel %vm104, %v98, 0
    %108 = vmatprep.subr.mxu0 0.0
    %109 = vmatpush1.msra.mxu0 %v103
    %110 = vmatprep.subr.mxu0 0.0
    %111 = vmatpush1.msra.mxu0 0.0
    %112 = vmatprep.subr.mxu0 0.0
    %113 = vmatpush1.msra.mxu0 0.0
    %114 = vmatprep.subr.mxu0 0.0
    %115 = vmatpush1.msra.mxu0 0.0
    %116 = vmatprep.subr.mxu0 0.0
    %117 = vmatpush1.msra.mxu0 0.0
    %118 = vmatprep.subr.mxu0 0.0
    %119 = vmatpush1.msra.mxu0 0.0
    %120 = vmatprep.subr.mxu0 0.0
    %121 = vmatpush1.msra.mxu0 0.0
    %122 = vmatprep.subr.mxu0 0.0
    %123 = vmatpush1.msra.mxu0 0.0
    %124 = vmatprep.subr.mxu0 0.0
    %125 = vmatpush1.msra.mxu0 0.0
    %126 = vmatprep.subr.mxu0 0.0
    %127 = vmatpush1.msra.mxu0 0.0
    %128 = vmatprep.subr.mxu0 0.0
    %129 = vmatpush1.msra.mxu0 0.0
    %130 = vmatprep.subr.mxu0 0.0
    %131 = vmatpush1.msra.mxu0 0.0
    %132 = vmatprep.subr.mxu0 0.0
    %133 = vmatpush1.msra.mxu0 0.0
    %134 = vmatprep.subr.mxu0 0.0
    %135 = vmatpush1.msra.mxu0 0.0
    %136 = vmatprep.subr.mxu0 0.0
    %137 = vmatpush1.msra.mxu0 0.0
    %138 = vmatprep.subr.mxu0 0.0
    %139 = vmatpush1.msra.mxu0 0.0
    %140 = vmatprep.subr.mxu0 0.0
    %141 = vmatpush1.msra.mxu0 0.0
    %142 = vmatprep.subr.mxu0 0.0
    %143 = vmatpush1.msra.mxu0 0.0
    %144 = vmatprep.subr.mxu0 0.0
    %145 = vmatpush1.msra.mxu0 0.0
    %146 = vmatprep.subr.mxu0 0.0
    %147 = vmatpush1.msra.mxu0 0.0
    %148 = vmatprep.subr.mxu0 0.0
    %149 = vmatpush1.msra.mxu0 0.0
    %150 = vmatprep.subr.mxu0 0.0
    %151 = vmatpush1.msra.mxu0 0.0
    %152 = vmatprep.subr.mxu0 0.0
    %153 = vmatpush1.msra.mxu0 0.0
    %154 = vmatprep.subr.mxu0 0.0
    %155 = vmatpush1.msra.mxu0 0.0
    %156 = vmatprep.subr.mxu0 0.0
    %157 = vmatpush1.msra.mxu0 0.0
    %158 = vmatprep.subr.mxu0 0.0
    %159 = vmatpush1.msra.mxu0 0.0
    %160 = vmatprep.subr.mxu0 0.0
    %161 = vmatpush1.msra.mxu0 0.0
    %162 = vmatprep.subr.mxu0 0.0
    %163 = vmatpush1.msra.mxu0 0.0
    %164 = vmatprep.subr.mxu0 0.0
    %165 = vmatpush1.msra.mxu0 0.0
    %166 = vmatprep.subr.mxu0 0.0
    %167 = vmatpush1.msra.mxu0 0.0
    %168 = vmatprep.subr.mxu0 0.0
    %169 = vmatpush1.msra.mxu0 0.0
    %170 = vmatprep.subr.mxu0 0.0
    %171 = vmatpush1.msra.mxu0 0.0
    %172 = vmatprep.mubr.f32.mxu0 0.0
    %173 = vmatmul.mubr.f32.gmra.mrb[0].mxu0 %v106
    %v174 = vpop.f32.mrb[0].mxu0
    %v175 = vadd.f32 0.0, %v174
    %v176 = vpop.f32.mrb[0].mxu0
    %177 = vdwg.mxu0
    %vm178 = vcmask 261120
    %v180 = vsel %vm178, %v97, 0
    %182 = vmatprep.subr.mxu0 0.0
    %183 = vmatpush1.msra.mxu0 %v99
    %184 = vmatprep.subr.mxu0 0.0
    %185 = vmatpush1.msra.mxu0 %v100
    %186 = vmatprep.subr.mxu0 0.0
    %187 = vmatpush1.msra.mxu0 %v101
    %188 = vmatprep.subr.mxu0 0.0
    %189 = vmatpush1.msra.mxu0 %v102
    %190 = vmatprep.subr.mxu0 0.0
    %191 = vmatpush1.msra.mxu0 0.0
    %192 = vmatprep.subr.mxu0 0.0
    %193 = vmatpush1.msra.mxu0 0.0
    %194 = vmatprep.subr.mxu0 0.0
    %195 = vmatpush1.msra.mxu0 0.0
    %196 = vmatprep.subr.mxu0 0.0
    %197 = vmatpush1.msra.mxu0 0.0
    %198 = vmatprep.subr.mxu0 0.0
    %199 = vmatpush1.msra.mxu0 0.0
    %200 = vmatprep.subr.mxu0 0.0
    %201 = vmatpush1.msra.mxu0 0.0
    %202 = vmatprep.subr.mxu0 0.0
    %203 = vmatpush1.msra.mxu0 0.0
    %204 = vmatprep.subr.mxu0 0.0
    %205 = vmatpush1.msra.mxu0 0.0
    %206 = vmatprep.subr.mxu0 0.0
    %207 = vmatpush1.msra.mxu0 0.0
    %208 = vmatprep.subr.mxu0 0.0
    %209 = vmatpush1.msra.mxu0 0.0
    %210 = vmatprep.subr.mxu0 0.0
    %211 = vmatpush1.msra.mxu0 0.0
    %212 = vmatprep.subr.mxu0 0.0
    %213 = vmatpush1.msra.mxu0 0.0
    %214 = vmatprep.subr.mxu0 0.0
    %215 = vmatpush1.msra.mxu0 0.0
    %216 = vmatprep.subr.mxu0 0.0
    %217 = vmatpush1.msra.mxu0 0.0
    %218 = vmatprep.subr.mxu0 0.0
    %219 = vmatpush1.msra.mxu0 0.0
    %220 = vmatprep.subr.mxu0 0.0
    %221 = vmatpush1.msra.mxu0 0.0
    %222 = vmatprep.subr.mxu0 0.0
    %223 = vmatpush1.msra.mxu0 0.0
    %224 = vmatprep.subr.mxu0 0.0
    %225 = vmatpush1.msra.mxu0 0.0
    %226 = vmatprep.subr.mxu0 0.0
    %227 = vmatpush1.msra.mxu0 0.0
    %228 = vmatprep.subr.mxu0 0.0
    %229 = vmatpush1.msra.mxu0 0.0
    %230 = vmatprep.subr.mxu0 0.0
    %231 = vmatpush1.msra.mxu0 0.0
    %232 = vmatprep.subr.mxu0 0.0
    %233 = vmatpush1.msra.mxu0 0.0
    %234 = vmatprep.subr.mxu0 0.0
    %235 = vmatpush1.msra.mxu0 0.0
    %236 = vmatprep.subr.mxu0 0.0
    %237 = vmatpush1.msra.mxu0 0.0
    %238 = vmatprep.subr.mxu0 0.0
    %239 = vmatpush1.msra.mxu0 0.0
    %240 = vmatprep.subr.mxu0 0.0
    %241 = vmatpush1.msra.mxu0 0.0
    %242 = vmatprep.subr.mxu0 0.0
    %243 = vmatpush1.msra.mxu0 0.0
    %244 = vmatprep.subr.mxu0 0.0
    %245 = vmatpush1.msra.mxu0 0.0
    %246 = vmatprep.mubr.f32.mxu0 0.0
    %247 = vmatmul.mubr.f32.gmra.mrb[0].mxu0 %v180
    %v248 = vpop.f32.mrb[0].mxu0
    %v249 = vadd.f32 %v175, %v248
    %v250 = vpop.f32.mrb[0].mxu0
    %251 = vdwg.mxu0
    %v252 = vld [vmem:[%s4] sm:$0x1]
    %v254 = vlaneseq
    %v255 = vshrl.u32 %v254, 7
    %v256 = vsub.s32 0, %v255
    %v257 = vrot.slane %v252, %v256
    %v259 = vadd.f32 %v249, %v257
    %v260 = vmax.f32 %v259, 0.0
    %v261 = vld [vmem:[#allocation8] sm:$0xff]
    %v262 = vld [vmem:[#allocation8 + $0x8] sm:$0xff]
    %v263 = vld [vmem:[#allocation8 + $0x10] sm:$0xff]
    %v264 = vld [vmem:[#allocation8 + $0x18] sm:$0xff]
    %v265 = vld [vmem:[%s6] sm:$0x1]
    %v267 = vlaneseq
    %v268 = vshrl.u32 %v267, 7
    %v269 = vsub.s32 0, %v268
    %v270 = vrot.slane %v265, %v269
    %v273 = vsel %vm178, %v260, 0
    %275 = vmatprep.subr.mxu0 0.0
    %276 = vmatpush1.msra.mxu0 %v261
    %277 = vmatprep.subr.mxu0 0.0
    %278 = vmatpush1.msra.mxu0 %v262
    %279 = vmatprep.subr.mxu0 0.0
    %280 = vmatpush1.msra.mxu0 %v263
    %281 = vmatprep.subr.mxu0 0.0
    %282 = vmatpush1.msra.mxu0 %v264
    %283 = vmatprep.subr.mxu0 0.0
    %284 = vmatpush1.msra.mxu0 0.0
    %285 = vmatprep.subr.mxu0 0.0
    %286 = vmatpush1.msra.mxu0 0.0
    %287 = vmatprep.subr.mxu0 0.0
    %288 = vmatpush1.msra.mxu0 0.0
    %289 = vmatprep.subr.mxu0 0.0
    %290 = vmatpush1.msra.mxu0 0.0
    %291 = vmatprep.subr.mxu0 0.0
    %292 = vmatpush1.msra.mxu0 0.0
    %293 = vmatprep.subr.mxu0 0.0
    %294 = vmatpush1.msra.mxu0 0.0
    %295 = vmatprep.subr.mxu0 0.0
    %296 = vmatpush1.msra.mxu0 0.0
    %297 = vmatprep.subr.mxu0 0.0
    %298 = vmatpush1.msra.mxu0 0.0
    %299 = vmatprep.subr.mxu0 0.0
    %300 = vmatpush1.msra.mxu0 0.0
    %301 = vmatprep.subr.mxu0 0.0
    %302 = vmatpush1.msra.mxu0 0.0
    %303 = vmatprep.subr.mxu0 0.0
    %304 = vmatpush1.msra.mxu0 0.0
    %305 = vmatprep.subr.mxu0 0.0
    %306 = vmatpush1.msra.mxu0 0.0
    %307 = vmatprep.subr.mxu0 0.0
    %308 = vmatpush1.msra.mxu0 0.0
    %309 = vmatprep.subr.mxu0 0.0
    %310 = vmatpush1.msra.mxu0 0.0
    %311 = vmatprep.subr.mxu0 0.0
    %312 = vmatpush1.msra.mxu0 0.0
    %313 = vmatprep.subr.mxu0 0.0
    %314 = vmatpush1.msra.mxu0 0.0
    %315 = vmatprep.subr.mxu0 0.0
    %316 = vmatpush1.msra.mxu0 0.0
    %317 = vmatprep.subr.mxu0 0.0
    %318 = vmatpush1.msra.mxu0 0.0
    %319 = vmatprep.subr.mxu0 0.0
    %320 = vmatpush1.msra.mxu0 0.0
    %321 = vmatprep.subr.mxu0 0.0
    %322 = vmatpush1.msra.mxu0 0.0
    %323 = vmatprep.subr.mxu0 0.0
    %324 = vmatpush1.msra.mxu0 0.0
    %325 = vmatprep.subr.mxu0 0.0
    %326 = vmatpush1.msra.mxu0 0.0
    %327 = vmatprep.subr.mxu0 0.0
    %328 = vmatpush1.msra.mxu0 0.0
    %329 = vmatprep.subr.mxu0 0.0
    %330 = vmatpush1.msra.mxu0 0.0
    %331 = vmatprep.subr.mxu0 0.0
    %332 = vmatpush1.msra.mxu0 0.0
    %333 = vmatprep.subr.mxu0 0.0
    %334 = vmatpush1.msra.mxu0 0.0
    %335 = vmatprep.subr.mxu0 0.0
    %336 = vmatpush1.msra.mxu0 0.0
    %337 = vmatprep.subr.mxu0 0.0
    %338 = vmatpush1.msra.mxu0 0.0
    %339 = vmatprep.mubr.f32.mxu0 0.0
    %340 = vmatmul.mubr.f32.gmra.mrb[0].mxu0 %v273
    %v341 = vpop.f32.mrb[0].mxu0
    %v342 = vadd.f32 %v270, %v341
    %v343 = vpop.f32.mrb[0].mxu0
    %344 = vdwg.mxu0
    %v345 = vmax.f32 %v342, 0.0
    %v346 = vld [vmem:[#allocation10] sm:$0xff]
    %v347 = vld [vmem:[#allocation10 + $0x8] sm:$0xff]
    %v348 = vld [vmem:[#allocation10 + $0x10] sm:$0xff]
    %v349 = vld [vmem:[#allocation10 + $0x18] sm:$0xff]
    %v350 = vld [vmem:[%s8] sm:$0x1]
    %v352 = vlaneseq
    %v353 = vshrl.u32 %v352, 7
    %v354 = vsub.s32 0, %v353
    %v355 = vrot.slane %v350, %v354
    %v358 = vsel %vm178, %v345, 0
    %360 = vmatprep.subr.mxu0 0.0
    %361 = vmatpush1.msra.mxu0 %v346
    %362 = vmatprep.subr.mxu0 0.0
    %363 = vmatpush1.msra.mxu0 %v347
    %364 = vmatprep.subr.mxu0 0.0
    %365 = vmatpush1.msra.mxu0 %v348
    %366 = vmatprep.subr.mxu0 0.0
    %367 = vmatpush1.msra.mxu0 %v349
    %368 = vmatprep.subr.mxu0 0.0
    %369 = vmatpush1.msra.mxu0 0.0
    %370 = vmatprep.subr.mxu0 0.0
    %371 = vmatpush1.msra.mxu0 0.0
    %372 = vmatprep.subr.mxu0 0.0
    %373 = vmatpush1.msra.mxu0 0.0
    %374 = vmatprep.subr.mxu0 0.0
    %375 = vmatpush1.msra.mxu0 0.0
    %376 = vmatprep.subr.mxu0 0.0
    %377 = vmatpush1.msra.mxu0 0.0
    %378 = vmatprep.subr.mxu0 0.0
    %379 = vmatpush1.msra.mxu0 0.0
    %380 = vmatprep.subr.mxu0 0.0
    %381 = vmatpush1.msra.mxu0 0.0
    %382 = vmatprep.subr.mxu0 0.0
    %383 = vmatpush1.msra.mxu0 0.0
    %384 = vmatprep.subr.mxu0 0.0
    %385 = vmatpush1.msra.mxu0 0.0
    %386 = vmatprep.subr.mxu0 0.0
    %387 = vmatpush1.msra.mxu0 0.0
    %388 = vmatprep.subr.mxu0 0.0
    %389 = vmatpush1.msra.mxu0 0.0
    %390 = vmatprep.subr.mxu0 0.0
    %391 = vmatpush1.msra.mxu0 0.0
    %392 = vmatprep.subr.mxu0 0.0
    %393 = vmatpush1.msra.mxu0 0.0
    %394 = vmatprep.subr.mxu0 0.0
    %395 = vmatpush1.msra.mxu0 0.0
    %396 = vmatprep.subr.mxu0 0.0
    %397 = vmatpush1.msra.mxu0 0.0
    %398 = vmatprep.subr.mxu0 0.0
    %399 = vmatpush1.msra.mxu0 0.0
    %400 = vmatprep.subr.mxu0 0.0
    %401 = vmatpush1.msra.mxu0 0.0
    %402 = vmatprep.subr.mxu0 0.0
    %403 = vmatpush1.msra.mxu0 0.0
    %404 = vmatprep.subr.mxu0 0.0
    %405 = vmatpush1.msra.mxu0 0.0
    %406 = vmatprep.subr.mxu0 0.0
    %407 = vmatpush1.msra.mxu0 0.0
    %408 = vmatprep.subr.mxu0 0.0
    %409 = vmatpush1.msra.mxu0 0.0
    %410 = vmatprep.subr.mxu0 0.0
    %411 = vmatpush1.msra.mxu0 0.0
    %412 = vmatprep.subr.mxu0 0.0
    %413 = vmatpush1.msra.mxu0 0.0
    %414 = vmatprep.subr.mxu0 0.0
    %415 = vmatpush1.msra.mxu0 0.0
    %416 = vmatprep.subr.mxu0 0.0
    %417 = vmatpush1.msra.mxu0 0.0
    %418 = vmatprep.subr.mxu0 0.0
    %419 = vmatpush1.msra.mxu0 0.0
    %420 = vmatprep.subr.mxu0 0.0
    %421 = vmatpush1.msra.mxu0 0.0
    %422 = vmatprep.subr.mxu0 0.0
    %423 = vmatpush1.msra.mxu0 0.0
    %424 = vmatprep.mubr.f32.mxu0 0.0
    %425 = vmatmul.mubr.f32.gmra.mrb[0].mxu0 %v358
    %v426 = vpop.f32.mrb[0].mxu0
    %v427 = vadd.f32 %v355, %v426
    %v428 = vpop.f32.mrb[0].mxu0
    %429 = vdwg.mxu0
    %v430 = vadd.f32 %v427, %v97
    %431 = vst.msk [vmem:[#allocation11] sm:$0xff] %vm178, %v430
    // Predicated region
    $region58: #{mlp_forward.1} parent=1 // pred_check
      _
    $region59: #{mlp_forward.1} parent=1 // pred_check_branch
      %433 = sbr.rel (0) target = $region61
    $region60: #{mlp_forward.1} parent=1 // pred_region
      %s435 = ssub.s32 128, 128
      %436 = vsyncadd [#allocation4], %s435
      %s438 = sshll.u32 [#allocation11], 4
      %s439 = int_to_ptr.vmem [resolvable:$true] %s438
      %441 = dma.vmem_to_hbm [thread:$0]  %s439, 128, %s9, [#allocation4]
    $region61: #{mlp_forward.1} parent=1 // pred_fallthru
      _
    // Predicated region
    $region62: #{mlp_forward.1} parent=1 // pred_check
      _
    $region63: #{mlp_forward.1} parent=1 // pred_check_branch
      %443 = sbr.rel (0) target = $region65
    $region64: #{mlp_forward.1} parent=1 // pred_region
      %444 = dma.done [#allocation4], 128
    $region65: #{mlp_forward.1} parent=1 // pred_fallthru
      _
    %445 = vsyncpa [#allocation3], 1
    %446 = vsyncpa [#allocation6], 1
    %447 = vsyncpa [#allocation9], 1
    %448 = vsyncpa [#allocation4], 1

</llo_original>
